<compile_context>
chip_gen: v7x
topology: tpu7x:2x2x1
jax: 0.10.0
libtpu: 0.0.40
codegen_flags: <defaults>
</compile_context>

<pallas_src>
import jax
import jax.numpy as jnp
from jax.experimental import pallas as pl
from jax.experimental.pallas import tpu as pltpu


def _round_up(n, m):
    return ((n + m - 1) // m) * m


def _pick_tn(dz_p, tn_max=512):
    if dz_p <= tn_max:
        return dz_p
    for cand in (512, 384, 256, 128):
        if cand <= tn_max and dz_p % cand == 0:
            return cand
    return 128  # dz_p is always a multiple of 128


def ib_mlp_kernel(x_ref, w1_ref, b1_ref, w2_ref, b2_ref, z_ref, h_ref):
    # h = relu(x @ W1 + b1) is shared by every N tile of this batch tile:
    # compute it once, at the first N step, into VMEM scratch.
    @pl.when(pl.program_id(1) == 0)
    def _():
        h = jnp.dot(x_ref[...], w1_ref[...], preferred_element_type=jnp.float32)
        h = jnp.maximum(h + b1_ref[...], 0.0)          # bias + ReLU in f32 (VPU)
        h_ref[...] = h.astype(h_ref.dtype)             # one MXU-dtype cast / batch tile

    # z[:, j-tile] = h @ W2[:, j-tile] + b2[j-tile]
    z = jnp.dot(h_ref[...], w2_ref[...], preferred_element_type=jnp.float32)
    z_ref[...] = (z + b2_ref[...]).astype(z_ref.dtype)


def _spec(shape, index_map, *, single_buffer=False):
    if single_buffer:
        try:  # constant-index block: request a single VMEM buffer
            return pl.BlockSpec(shape, index_map, pipeline_mode=pl.Buffered(1))
        except (TypeError, AttributeError):
            pass
    return pl.BlockSpec(shape, index_map)


def pad_params(params, *, mxu_dtype=jnp.bfloat16):
    """One-time pad/cast of the IB weights (hoisted out of the per-call path).

    Weights stored pre-transposed as [in, out]; biases as [1, out].  The
    hidden/output dim Dz is zero-padded to a lane multiple (128) so the
    out_spec and both matmuls' N dims are lane-dense.  Zero padding contributes
    exactly zero to the real outputs (results identical after slicing).
    """
    w1, b1, w2, b2 = params["w1"], params["b1"], params["w2"], params["b2"]
    dx, dz = w1.shape
    dz_p = _round_up(dz, 128)
    f32 = jnp.float32
    return {
        "w1": jnp.pad(w1.astype(mxu_dtype), ((0, 0), (0, dz_p - dz))),
        "b1": jnp.pad(b1.astype(f32), ((0, 0), (0, dz_p - dz))),
        "w2": jnp.pad(w2.astype(mxu_dtype), ((0, dz_p - dz), (0, dz_p - dz))),
        "b2": jnp.pad(b2.astype(f32), ((0, 0), (0, dz_p - dz))),
        "Dx": dx,
        "Dz": dz,
        "Dz_p": dz_p,
        "mxu_dtype": mxu_dtype,
    }


def ib_forward(x, y, padded, *, task_id, per_class, tb=256, tn=None,
               out_dtype=jnp.float32):
    """Replicates IB.forward: returns (z, one_hot(y)).

    x: [B, shape_x].  `padded` comes from pad_params (weights padded/cast
    once).  MXU inputs use padded['mxu_dtype'] (bf16 default); accumulation
    and the bias/ReLU epilogue stay f32.
    """
    dx, dz, dz_p = padded["Dx"], padded["Dz"], padded["Dz_p"]
    in_dt = padded["mxu_dtype"]
    B = x.shape[0]
    assert x.shape[1] == dx

    # Batch tiling: default tb=256 (sweep 256-512 for big batches); capped at
    # the sublane-rounded batch so tiny batches do not pad to a full tile.
    tb = min(tb, _round_up(B, 8))
    b_p = _round_up(B, tb)
    if tn is None:
        tn = _pick_tn(dz_p)
    nb, nn = b_p // tb, dz_p // tn

    # Per-call work touches x only: MXU-dtype cast + batch pad (K dim of x is
    # left unpadded -- full-dim blocks are exempt from the (8,128) rule).
    x_p = x.astype(in_dt)
    if b_p != B:
        x_p = jnp.pad(x_p, ((0, b_p - B), (0, 0)))

    isz = jnp.dtype(in_dt).itemsize
    osz = jnp.dtype(out_dtype).itemsize

    # VMEM footprint upper bound (double-buffered W2/b2/x/z, resident W1/b1/h)
    # with headroom; capped at 48 MiB so it stays inside v7x's 64 MiB per TC.
    vmem_need = (
        dx * dz_p * isz + dz_p * 4
        + 2 * (dz_p * tn * isz + tn * 4)
        + 2 * tb * dx * isz
        + 2 * tb * tn * osz
        + tb * dz_p * isz
    )
    vmem_limit = int(min(48 * 1024 * 1024, max(2 * vmem_need, 16 * 1024 * 1024)))

    cost = pl.CostEstimate(
        flops=2 * b_p * dx * dz_p + 2 * b_p * dz_p * dz_p,
        transcendentals=0,
        bytes_accessed=(b_p * dx * isz
                        + dx * dz_p * isz + dz_p * 4
                        + nb * (dz_p * dz_p * isz + dz_p * 4)
                        + b_p * dz_p * osz),
    )

    def call(single_buffer_weights):
        sbw = single_buffer_weights
        in_specs = [
            pl.BlockSpec((tb, dx), lambda i, j: (i, 0)),                 # x tile
            _spec((dx, dz_p), lambda i, j: (0, 0), single_buffer=sbw),   # W1 (resident)
            _spec((1, dz_p), lambda i, j: (0, 0), single_buffer=sbw),    # b1
            _spec((dz_p, tn), lambda i, j: (0, j),
                  single_buffer=sbw and nn == 1),                        # W2 N tile
            _spec((1, tn), lambda i, j: (0, j),
                  single_buffer=sbw and nn == 1),                        # b2 N tile
        ]
        return pl.pallas_call(
            ib_mlp_kernel,
            out_shape=jax.ShapeDtypeStruct((b_p, dz_p), out_dtype),
            grid_spec=pltpu.PrefetchScalarGridSpec(
                num_scalar_prefetch=0,
                grid=(nb, nn),                        # N axis innermost
                in_specs=in_specs,
                out_specs=pl.BlockSpec((tb, tn), lambda i, j: (i, j)),
                scratch_shapes=[pltpu.VMEM((tb, dz_p), in_dt)],   # h scratch
            ),
            compiler_params=pltpu.CompilerParams(
                dimension_semantics=("parallel", "arbitrary"),
                vmem_limit_bytes=vmem_limit,
            ),
            cost_estimate=cost,
        )(x_p, padded["w1"], padded["b1"], padded["w2"], padded["b2"])

    try:
        z_pad = call(True)
    except Exception:
        # pipeline_mode=pl.Buffered(1) rejected by this jax/Mosaic build:
        # fall back to default buffering for the constant weight blocks.
        z_pad = call(False)

    z = z_pad[:B, :dz]

    # Labels path: F.one_hot(y, (task_id+1)*per_class)  (ch_IB='m', dis_IB=False).
    # TODO(synk): torch returns int64 one-hot; int32 kept here (values identical).
    n_classes = (task_id + 1) * per_class
    y_onehot = jax.nn.one_hot(y, n_classes, dtype=jnp.int32)
    return z, y_onehot


def init_params(key, shape_x, shape_z, dtype=jnp.float32):
    # nn.Linear-style init (uniform +/- 1/sqrt(fan_in)); weights stored [in, out].
    k1, k2, k3, k4 = jax.random.split(key, 4)
    lim1 = 1.0 / jnp.sqrt(shape_x)
    lim2 = 1.0 / jnp.sqrt(shape_z)
    return {
        "w1": jax.random.uniform(k1, (shape_x, shape_z), dtype, -lim1, lim1),
        "b1": jax.random.uniform(k2, (1, shape_z), dtype, -lim1, lim1),
        "w2": jax.random.uniform(k3, (shape_z, shape_z), dtype, -lim2, lim2),
        "b2": jax.random.uniform(k4, (1, shape_z), dtype, -lim2, lim2),
    }


if __name__ == "__main__":
    key = jax.random.PRNGKey(0)
    kx, ky, kp = jax.random.split(key, 3)

    B, shape_x, shape_z = 8, 32, 32
    per_class, task_id = 4, 1            # -> 8 label classes

    x = jax.random.normal(kx, (B, shape_x), jnp.float32)
    y = jax.random.randint(ky, (B,), 0, (task_id + 1) * per_class)
    params = init_params(kp, shape_x, shape_z)

    # Pure-JAX reference.
    h_ref = jnp.maximum(x @ params["w1"] + params["b1"], 0.0)
    z_ref = h_ref @ params["w2"] + params["b2"]

    # Exact f32-MXU path: tight tolerance check.
    padded_f32 = pad_params(params, mxu_dtype=jnp.float32)
    z_f32, y_onehot = ib_forward(x, y, padded_f32, task_id=task_id,
                                 per_class=per_class)
    jax.block_until_ready(z_f32)
    jax.block_until_ready(y_onehot)
    assert z_f32.shape == z_ref.shape
    assert jnp.allclose(z_f32, z_ref, atol=1e-5, rtol=1e-5), "f32 mismatch"
    assert int(y_onehot.sum()) == B
    assert jnp.array_equal(jnp.argmax(y_onehot, axis=-1), y)

    # Default bf16-MXU path (f32 accumulation): loose tolerance check.
    padded_bf16 = pad_params(params)     # mxu_dtype defaults to bf16
    z_bf16, _ = ib_forward(x, y, padded_bf16, task_id=task_id,
                           per_class=per_class)
    jax.block_until_ready(z_bf16)
    assert jnp.allclose(z_bf16, z_ref, atol=5e-2, rtol=5e-2), "bf16 mismatch"

    # bf16 consumer-dtype output (halves z writeback bytes).
    z_bf16_out, _ = ib_forward(x, y, padded_bf16, task_id=task_id,
                               per_class=per_class, out_dtype=jnp.bfloat16)
    jax.block_until_ready(z_bf16_out)
    assert jnp.allclose(z_bf16_out.astype(jnp.float32), z_ref,
                        atol=1e-1, rtol=1e-1), "bf16-out mismatch"

    # TODO(synk): train_net / CLUBSample / MINE losses (optimizers, Sinkhorn via
    # `ot`, stateful x_list/y_list buffering) are training-time side paths and
    # not part of IB.forward's returned value.
    print("KERNEL_OK")
</pallas_src>

<mosaic_0001>
module attributes {stable_mosaic.version = 11 : i64} {
  func.func @ib_mlp_kernel(%arg0: i32, %arg1: i32, %arg2: memref<8x32xf32, #tpu.memory_space<vmem>>, %arg3: memref<32x128xf32, #tpu.memory_space<vmem>>, %arg4: memref<1x128xf32, #tpu.memory_space<vmem>>, %arg5: memref<128x128xf32, #tpu.memory_space<vmem>>, %arg6: memref<1x128xf32, #tpu.memory_space<vmem>>, %arg7: memref<8x128xf32, #tpu.memory_space<vmem>>, %arg8: memref<8x128xf32, #tpu.memory_space<vmem>>) attributes {dimension_semantics = [#tpu.dimension_semantics<parallel>, #tpu.dimension_semantics<arbitrary>], iteration_bounds = array<i64: 1, 1>, scalar_prefetch = 0 : i64, scratch_operands = 1 : i64, tpu.core_type = #tpu.core_type<tc>, window_params = [{transform_indices = @transform_0, window_bounds = array<i64: 8, 32>}, {pipeline_mode = #tpu.pipeline_mode<synchronous>, transform_indices = @transform_1, window_bounds = array<i64: 32, 128>}, {pipeline_mode = #tpu.pipeline_mode<synchronous>, transform_indices = @transform_2, window_bounds = array<i64: 1, 128>}, {pipeline_mode = #tpu.pipeline_mode<synchronous>, transform_indices = @transform_3, window_bounds = array<i64: 128, 128>}, {pipeline_mode = #tpu.pipeline_mode<synchronous>, transform_indices = @transform_4, window_bounds = array<i64: 1, 128>}, {transform_indices = @transform_5, window_bounds = array<i64: 8, 128>}]} {
    %c0_i32 = arith.constant 0 : i32
    %0 = arith.cmpi eq, %arg1, %c0_i32 : i32
    %1 = arith.extui %0 : i1 to i32
    %c0_i32_0 = arith.constant 0 : i32
    %2 = arith.cmpi ne, %1, %c0_i32_0 : i32
    scf.if %2 {
      %c0_8 = arith.constant 0 : index
      %c0_9 = arith.constant 0 : index
      %10 = vector.load %arg2[%c0_8, %c0_9] : memref<8x32xf32, #tpu.memory_space<vmem>>, vector<8x32xf32>
      %c0_10 = arith.constant 0 : index
      %c0_11 = arith.constant 0 : index
      %11 = vector.load %arg3[%c0_10, %c0_11] : memref<32x128xf32, #tpu.memory_space<vmem>>, vector<32x128xf32>
      %cst_12 = arith.constant dense<0.000000e+00> : vector<8x128xf32>
      %12 = tpu.matmul %10, %11, %cst_12 {dimension_numbers = #tpu.dot_dimension_numbers<[1], [0], [0], [1], [0, 0, 1, 1], [], []>} : vector<8x32xf32>, vector<32x128xf32>, vector<8x128xf32> -> vector<8x128xf32>
      %c0_13 = arith.constant 0 : index
      %c0_14 = arith.constant 0 : index
      %13 = vector.load %arg4[%c0_13, %c0_14] : memref<1x128xf32, #tpu.memory_space<vmem>>, vector<1x128xf32>
      %14 = vector.broadcast %13 : vector<1x128xf32> to vector<8x128xf32>
      %15 = arith.addf %12, %14 : vector<8x128xf32>
      %cst_15 = arith.constant 0.000000e+00 : f32
      %16 = vector.broadcast %cst_15 : f32 to vector<8x128xf32>
      %17 = arith.maximumf %15, %16 : vector<8x128xf32>
      %c0_16 = arith.constant 0 : index
      %c0_17 = arith.constant 0 : index
      %18 = vector.load %arg8[%c0_16, %c0_17] : memref<8x128xf32, #tpu.memory_space<vmem>>, vector<8x128xf32>
      tpu.vector_store %arg8[%c0_16, %c0_17], %17 {strides = array<i32>} : memref<8x128xf32, #tpu.memory_space<vmem>>, vector<8x128xf32>,
    } else {
    }
    %c0 = arith.constant 0 : index
    %c0_1 = arith.constant 0 : index
    %3 = vector.load %arg8[%c0, %c0_1] : memref<8x128xf32, #tpu.memory_space<vmem>>, vector<8x128xf32>
    %c0_2 = arith.constant 0 : index
    %c0_3 = arith.constant 0 : index
    %4 = vector.load %arg5[%c0_2, %c0_3] : memref<128x128xf32, #tpu.memory_space<vmem>>, vector<128x128xf32>
    %cst = arith.constant dense<0.000000e+00> : vector<8x128xf32>
    %5 = tpu.matmul %3, %4, %cst {dimension_numbers = #tpu.dot_dimension_numbers<[1], [0], [0], [1], [0, 0, 1, 1], [], []>} : vector<8x128xf32>, vector<128x128xf32>, vector<8x128xf32> -> vector<8x128xf32>
    %c0_4 = arith.constant 0 : index
    %c0_5 = arith.constant 0 : index
    %6 = vector.load %arg6[%c0_4, %c0_5] : memref<1x128xf32, #tpu.memory_space<vmem>>, vector<1x128xf32>
    %7 = vector.broadcast %6 : vector<1x128xf32> to vector<8x128xf32>
    %8 = arith.addf %5, %7 : vector<8x128xf32>
    %c0_6 = arith.constant 0 : index
    %c0_7 = arith.constant 0 : index
    %9 = vector.load %arg7[%c0_6, %c0_7] : memref<8x128xf32, #tpu.memory_space<vmem>>, vector<8x128xf32>
    tpu.vector_store %arg7[%c0_6, %c0_7], %8 {strides = array<i32>} : memref<8x128xf32, #tpu.memory_space<vmem>>, vector<8x128xf32>,
    return
  }
  func.func @transform_0(%arg0: i32, %arg1: i32) -> (i32, i32) {
    %c0_i32 = arith.constant 0 : i32
    %c0_i32_0 = arith.constant 0 : i32
    return %arg0, %c0_i32 : i32, i32
  }
  func.func @transform_1(%arg0: i32, %arg1: i32) -> (i32, i32) {
    %c0_i32 = arith.constant 0 : i32
    %c0_i32_0 = arith.constant 0 : i32
    %c0_i32_1 = arith.constant 0 : i32
    return %c0_i32, %c0_i32_0 : i32, i32
  }
  func.func @transform_2(%arg0: i32, %arg1: i32) -> (i32, i32) {
    %c0_i32 = arith.constant 0 : i32
    %c0_i32_0 = arith.constant 0 : i32
    %c0_i32_1 = arith.constant 0 : i32
    return %c0_i32, %c0_i32_0 : i32, i32
  }
  func.func @transform_3(%arg0: i32, %arg1: i32) -> (i32, i32) {
    %c0_i32 = arith.constant 0 : i32
    %c0_i32_0 = arith.constant 0 : i32
    return %c0_i32, %arg1 : i32, i32
  }
  func.func @transform_4(%arg0: i32, %arg1: i32) -> (i32, i32) {
    %c0_i32 = arith.constant 0 : i32
    %c0_i32_0 = arith.constant 0 : i32
    return %c0_i32, %arg1 : i32, i32
  }
  func.func @transform_5(%arg0: i32, %arg1: i32) -> (i32, i32) {
    %c0_i32 = arith.constant 0 : i32
    return %arg0, %arg1 : i32, i32
  }
}

module attributes {stable_mosaic.version = 11 : i64} {
  func.func @ib_mlp_kernel(%arg0: i32, %arg1: i32, %arg2: memref<8x32xf32, #tpu.memory_space<vmem>>, %arg3: memref<32x128xf32, #tpu.memory_space<vmem>>, %arg4: memref<1x128xf32, #tpu.memory_space<vmem>>, %arg5: memref<128x128xf32, #tpu.memory_space<vmem>>, %arg6: memref<1x128xf32, #tpu.memory_space<vmem>>, %arg7: memref<8x128xf32, #tpu.memory_space<vmem>>, %arg8: memref<8x128xf32, #tpu.memory_space<vmem>>) attributes {dimension_semantics = [#tpu.dimension_semantics<parallel>, #tpu.dimension_semantics<arbitrary>], iteration_bounds = array<i64: 1, 1>, scalar_prefetch = 0 : i64, scratch_operands = 1 : i64, tpu.core_type = #tpu.core_type<tc>, window_params = [{transform_indices = @transform_0, window_bounds = array<i64: 8, 32>}, {pipeline_mode = #tpu.pipeline_mode<synchronous>, transform_indices = @transform_1, window_bounds = array<i64: 32, 128>}, {pipeline_mode = #tpu.pipeline_mode<synchronous>, transform_indices = @transform_2, window_bounds = array<i64: 1, 128>}, {transform_indices = @transform_3, window_bounds = array<i64: 128, 128>}, {transform_indices = @transform_4, window_bounds = array<i64: 1, 128>}, {transform_indices = @transform_5, window_bounds = array<i64: 8, 128>}]} {
    %c0_i32 = arith.constant 0 : i32
    %0 = arith.cmpi eq, %arg1, %c0_i32 : i32
    %1 = arith.extui %0 : i1 to i32
    %c0_i32_0 = arith.constant 0 : i32
    %2 = arith.cmpi ne, %1, %c0_i32_0 : i32
    scf.if %2 {
      %c0_8 = arith.constant 0 : index
      %c0_9 = arith.constant 0 : index
      %10 = vector.load %arg2[%c0_8, %c0_9] : memref<8x32xf32, #tpu.memory_space<vmem>>, vector<8x32xf32>
      %c0_10 = arith.constant 0 : index
      %c0_11 = arith.constant 0 : index
      %11 = vector.load %arg3[%c0_10, %c0_11] : memref<32x128xf32, #tpu.memory_space<vmem>>, vector<32x128xf32>
      %cst_12 = arith.constant dense<0.000000e+00> : vector<8x128xf32>
      %12 = tpu.matmul %10, %11, %cst_12 {dimension_numbers = #tpu.dot_dimension_numbers<[1], [0], [0], [1], [0, 0, 1, 1], [], []>} : vector<8x32xf32>, vector<32x128xf32>, vector<8x128xf32> -> vector<8x128xf32>
      %c0_13 = arith.constant 0 : index
      %c0_14 = arith.constant 0 : index
      %13 = vector.load %arg4[%c0_13, %c0_14] : memref<1x128xf32, #tpu.memory_space<vmem>>, vector<1x128xf32>
      %14 = vector.broadcast %13 : vector<1x128xf32> to vector<8x128xf32>
      %15 = arith.addf %12, %14 : vector<8x128xf32>
      %cst_15 = arith.constant 0.000000e+00 : f32
      %16 = vector.broadcast %cst_15 : f32 to vector<8x128xf32>
      %17 = arith.maximumf %15, %16 : vector<8x128xf32>
      %c0_16 = arith.constant 0 : index
      %c0_17 = arith.constant 0 : index
      %18 = vector.load %arg8[%c0_16, %c0_17] : memref<8x128xf32, #tpu.memory_space<vmem>>, vector<8x128xf32>
      tpu.vector_store %arg8[%c0_16, %c0_17], %17 {strides = array<i32>} : memref<8x128xf32, #tpu.memory_space<vmem>>, vector<8x128xf32>,
    } else {
    }
    %c0 = arith.constant 0 : index
    %c0_1 = arith.constant 0 : index
    %3 = vector.load %arg8[%c0, %c0_1] : memref<8x128xf32, #tpu.memory_space<vmem>>, vector<8x128xf32>
    %c0_2 = arith.constant 0 : index
    %c0_3 = arith.constant 0 : index
    %4 = vector.load %arg5[%c0_2, %c0_3] : memref<128x128xf32, #tpu.memory_space<vmem>>, vector<128x128xf32>
    %cst = arith.constant dense<0.000000e+00> : vector<8x128xf32>
    %5 = tpu.matmul %3, %4, %cst {dimension_numbers = #tpu.dot_dimension_numbers<[1], [0], [0], [1], [0, 0, 1, 1], [], []>} : vector<8x128xf32>, vector<128x128xf32>, vector<8x128xf32> -> vector<8x128xf32>
    %c0_4 = arith.constant 0 : index
    %c0_5 = arith.constant 0 : index
    %6 = vector.load %arg6[%c0_4, %c0_5] : memref<1x128xf32, #tpu.memory_space<vmem>>, vector<1x128xf32>
    %7 = vector.broadcast %6 : vector<1x128xf32> to vector<8x128xf32>
    %8 = arith.addf %5, %7 : vector<8x128xf32>
    %c0_6 = arith.constant 0 : index
    %c0_7 = arith.constant 0 : index
    %9 = vector.load %arg7[%c0_6, %c0_7] : memref<8x128xf32, #tpu.memory_space<vmem>>, vector<8x128xf32>
    tpu.vector_store %arg7[%c0_6, %c0_7], %8 {strides = array<i32>} : memref<8x128xf32, #tpu.memory_space<vmem>>, vector<8x128xf32>,
    return
  }
  func.func @transform_0(%arg0: i32, %arg1: i32) -> (i32, i32) {
    %c0_i32 = arith.constant 0 : i32
    %c0_i32_0 = arith.constant 0 : i32
    return %arg0, %c0_i32 : i32, i32
  }
  func.func @transform_1(%arg0: i32, %arg1: i32) -> (i32, i32) {
    %c0_i32 = arith.constant 0 : i32
    %c0_i32_0 = arith.constant 0 : i32
    %c0_i32_1 = arith.constant 0 : i32
    return %c0_i32, %c0_i32_0 : i32, i32
  }
  func.func @transform_2(%arg0: i32, %arg1: i32) -> (i32, i32) {
    %c0_i32 = arith.constant 0 : i32
    %c0_i32_0 = arith.constant 0 : i32
    %c0_i32_1 = arith.constant 0 : i32
    return %c0_i32, %c0_i32_0 : i32, i32
  }
  func.func @transform_3(%arg0: i32, %arg1: i32) -> (i32, i32) {
    %c0_i32 = arith.constant 0 : i32
    %c0_i32_0 = arith.constant 0 : i32
    return %c0_i32, %arg1 : i32, i32
  }
  func.func @transform_4(%arg0: i32, %arg1: i32) -> (i32, i32) {
    %c0_i32 = arith.constant 0 : i32
    %c0_i32_0 = arith.constant 0 : i32
    return %c0_i32, %arg1 : i32, i32
  }
  func.func @transform_5(%arg0: i32, %arg1: i32) -> (i32, i32) {
    %c0_i32 = arith.constant 0 : i32
    return %arg0, %arg1 : i32, i32
  }
}

</mosaic_0001>

<llo_original>
// kernel: tpu_custom_call.1
$region0: #{tpu_custom_call.1}
  #allocation0 [shape = 'u32[]', space=smem, size = 0x4, offset = 0x4, fixed_abs, tag = 'smem constant byte address 0x4 - core index']
  #allocation1 [shape = 'u32[144,128]{1,0:T(1,128)}', space=vmem, size = 0x12000, scoped, tag = 'internal scratch']
  #allocation2 [shape = 'f32[8,128]{1,0:T(8,128)}', space=vmem, size = 0x1000, scoped, tag = 'scratch operand']
  %s0 = inlined_call_operand.hbm [shape: f32[8,32], index: 0, kind: input, shape index: {}]
  %s1 = inlined_call_operand.hbm [shape: f32[32,128], index: 1, kind: input, shape index: {}]
  %s2 = inlined_call_operand.vmem [shape: f32[1,128], index: 2, kind: input, shape index: {}]
  %s3 = inlined_call_operand.hbm [shape: f32[128,128], index: 3, kind: input, shape index: {}]
  %s4 = inlined_call_operand.vmem [shape: f32[1,128], index: 4, kind: input, shape index: {}]
  %s5 = inlined_call_operand.hbm [shape: f32[8,128], index: 5, kind: output, shape index: {}]
  %s6 = sld [smem:[#allocation0]]
  $region46: #{tpu_custom_call.1} parent=0
    _
  %s8 = ssub.s32 1, %s6
  %s9 = scalar_select 0, %s8, %s6
  $region1: #{tpu_custom_call.1} parent=0
    #allocation3 [shape = 'u8[4096]{0}', space=vmem, size = 0x1000, scoped, tag = 'input window, operand 0, single buffered']
    #allocation4 [shape = 's32[1]{0}', space=sflag, size = 0x4, scoped, tag = 'scoped memory for tpu_custom_call.1']
    #allocation5 [shape = 's32[1]{0}', space=sflag, size = 0x4, scoped, tag = 'scoped memory for tpu_custom_call.1']
    #allocation6 [shape = 'u8[16384]{0}', space=vmem, size = 0x4000, scoped, tag = 'input window, operand 1, single buffered']
    #allocation7 [shape = 's32[1]{0}', space=sflag, size = 0x4, scoped, tag = 'scoped memory for tpu_custom_call.1']
    #allocation8 [shape = 'u8[65536]{0}', space=vmem, size = 0x10000, scoped, tag = 'input window, operand 3, single buffered']
    #allocation9 [shape = 'u8[4096]{0}', space=vmem, size = 0x1000, scoped, tag = 'output window, operand 0, single buffered']
    %10 = vsyncpa [#allocation4], 0
    %11 = vsyncpa [#allocation7], 0
    %12 = vsyncpa [#allocation5], 0
    // Predicated region
    $region2: #{tpu_custom_call.1} parent=1 // pred_check
      _
    $region3: #{tpu_custom_call.1} parent=1 // pred_check_branch
      %14 = sbr.rel (0) target = $region5
    $region4: #{tpu_custom_call.1} parent=1 // pred_region
      %s16 = ssub.s32 128, 128
      %17 = vsyncadd [#allocation4], %s16
      %s19 = sshll.u32 [#allocation3], 4
      %s20 = int_to_ptr.vmem [resolvable:$true] %s19
      %22 = dma.hbm_to_vmem [thread:$0]  %s0, 128, %s20, [#allocation4]
    $region5: #{tpu_custom_call.1} parent=1 // pred_fallthru
      _
    // Predicated region
    $region6: #{tpu_custom_call.1} parent=1 // pred_check
      _
    $region7: #{tpu_custom_call.1} parent=1 // pred_check_branch
      %24 = sbr.rel (0) target = $region9
    $region8: #{tpu_custom_call.1} parent=1 // pred_region
      %s26 = ssub.s32 512, 512
      %27 = vsyncadd [#allocation7], %s26
      %s28 = sshll.u32 [#allocation6], 4
      %s29 = int_to_ptr.vmem [resolvable:$true] %s28
      %34 = dma.hbm_to_vmem [thread:$0]  %s1, 512, %s29, [#allocation7], 128, 128, 8
    $region9: #{tpu_custom_call.1} parent=1 // pred_fallthru
      _
    // Predicated region
    $region10: #{tpu_custom_call.1} parent=1 // pred_check
      _
    $region11: #{tpu_custom_call.1} parent=1 // pred_check_branch
      %36 = sbr.rel (0) target = $region13
    $region12: #{tpu_custom_call.1} parent=1 // pred_region
      _
    $region13: #{tpu_custom_call.1} parent=1 // pred_fallthru
      _
    // Predicated region
    $region14: #{tpu_custom_call.1} parent=1 // pred_check
      _
    $region15: #{tpu_custom_call.1} parent=1 // pred_check_branch
      %38 = sbr.rel (0) target = $region17
    $region16: #{tpu_custom_call.1} parent=1 // pred_region
      %s40 = ssub.s32 2048, 2048
      %41 = vsyncadd [#allocation7], %s40
      %s42 = sshll.u32 [#allocation8], 4
      %s43 = int_to_ptr.vmem [resolvable:$true] %s42
      %48 = dma.hbm_to_vmem [thread:$0]  %s3, 2048, %s43, [#allocation7], 128, 128, 8
    $region17: #{tpu_custom_call.1} parent=1 // pred_fallthru
      _
    // Predicated region
    $region18: #{tpu_custom_call.1} parent=1 // pred_check
      _
    $region19: #{tpu_custom_call.1} parent=1 // pred_check_branch
      %50 = sbr.rel (0) target = $region21
    $region20: #{tpu_custom_call.1} parent=1 // pred_region
      _
    $region21: #{tpu_custom_call.1} parent=1 // pred_fallthru
      _
    // Predicated region
    $region22: #{tpu_custom_call.1} parent=1 // pred_check
      _
    $region23: #{tpu_custom_call.1} parent=1 // pred_check_branch
      %52 = sbr.rel (0) target = $region25
    $region24: #{tpu_custom_call.1} parent=1 // pred_region
      %53 = dma.done [#allocation4], 128
    $region25: #{tpu_custom_call.1} parent=1 // pred_fallthru
      _
    // Predicated region
    $region26: #{tpu_custom_call.1} parent=1 // pred_check
      _
    $region27: #{tpu_custom_call.1} parent=1 // pred_check_branch
      %55 = sbr.rel (0) target = $region29
    $region28: #{tpu_custom_call.1} parent=1 // pred_region
      %56 = dma.done [#allocation7], 512
    $region29: #{tpu_custom_call.1} parent=1 // pred_fallthru
      _
    // Predicated region
    $region30: #{tpu_custom_call.1} parent=1 // pred_check
      _
    $region31: #{tpu_custom_call.1} parent=1 // pred_check_branch
      %58 = sbr.rel (0) target = $region33
    $region32: #{tpu_custom_call.1} parent=1 // pred_region
      %59 = dma.done [#allocation7], 2048
    $region33: #{tpu_custom_call.1} parent=1 // pred_fallthru
      _
    %p60 = scmp.eq.s32.totalorder 0, 0
    // Predicated region
    $region34: #{tpu_custom_call.1} parent=1 // pred_check
      %p61 = pneg %p60
    $region35: #{tpu_custom_call.1} parent=1 // pred_check_branch
      %63 = sbr.rel (%p61) target = $region37
    $region36: #{tpu_custom_call.1} parent=1 // pred_region
      %v64 = vld [vmem:[#allocation3] sm:$0xff]
      %v65 = vld [vmem:[#allocation6] sm:$0xff]
      %v66 = vld [vmem:[#allocation6 + $0x8] sm:$0xff]
      %v67 = vld [vmem:[#allocation6 + $0x10] sm:$0xff]
      %v68 = vld [vmem:[#allocation6 + $0x18] sm:$0xff]
      %v69 = vld [vmem:[%s2] sm:$0x1]
      %v71 = vlaneseq
      %v72 = vshrl.u32 %v71, 7
      %v73 = vsub.s32 0, %v72
      %v74 = vrot.slane %v69, %v73
      %vm76 = vcmask 261120
      %v78 = vsel %vm76, %v64, 0
      %80 = vmatprep.subr.mxu0 0.0
      %81 = vmatpush1.msra.mxu0 %v65
      %82 = vmatprep.subr.mxu0 0.0
      %83 = vmatpush1.msra.mxu0 %v66
      %84 = vmatprep.subr.mxu0 0.0
      %85 = vmatpush1.msra.mxu0 %v67
      %86 = vmatprep.subr.mxu0 0.0
      %87 = vmatpush1.msra.mxu0 %v68
      %88 = vmatprep.subr.mxu0 0.0
      %89 = vmatpush1.msra.mxu0 0.0
      %90 = vmatprep.subr.mxu0 0.0
      %91 = vmatpush1.msra.mxu0 0.0
      %92 = vmatprep.subr.mxu0 0.0
      %93 = vmatpush1.msra.mxu0 0.0
      %94 = vmatprep.subr.mxu0 0.0
      %95 = vmatpush1.msra.mxu0 0.0
      %96 = vmatprep.subr.mxu0 0.0
      %97 = vmatpush1.msra.mxu0 0.0
      %98 = vmatprep.subr.mxu0 0.0
      %99 = vmatpush1.msra.mxu0 0.0
      %100 = vmatprep.subr.mxu0 0.0
      %101 = vmatpush1.msra.mxu0 0.0
      %102 = vmatprep.subr.mxu0 0.0
      %103 = vmatpush1.msra.mxu0 0.0
      %104 = vmatprep.subr.mxu0 0.0
      %105 = vmatpush1.msra.mxu0 0.0
      %106 = vmatprep.subr.mxu0 0.0
      %107 = vmatpush1.msra.mxu0 0.0
      %108 = vmatprep.subr.mxu0 0.0
      %109 = vmatpush1.msra.mxu0 0.0
      %110 = vmatprep.subr.mxu0 0.0
      %111 = vmatpush1.msra.mxu0 0.0
      %112 = vmatprep.subr.mxu0 0.0
      %113 = vmatpush1.msra.mxu0 0.0
      %114 = vmatprep.subr.mxu0 0.0
      %115 = vmatpush1.msra.mxu0 0.0
      %116 = vmatprep.subr.mxu0 0.0
      %117 = vmatpush1.msra.mxu0 0.0
      %118 = vmatprep.subr.mxu0 0.0
      %119 = vmatpush1.msra.mxu0 0.0
      %120 = vmatprep.subr.mxu0 0.0
      %121 = vmatpush1.msra.mxu0 0.0
      %122 = vmatprep.subr.mxu0 0.0
      %123 = vmatpush1.msra.mxu0 0.0
      %124 = vmatprep.subr.mxu0 0.0
      %125 = vmatpush1.msra.mxu0 0.0
      %126 = vmatprep.subr.mxu0 0.0
      %127 = vmatpush1.msra.mxu0 0.0
      %128 = vmatprep.subr.mxu0 0.0
      %129 = vmatpush1.msra.mxu0 0.0
      %130 = vmatprep.subr.mxu0 0.0
      %131 = vmatpush1.msra.mxu0 0.0
      %132 = vmatprep.subr.mxu0 0.0
      %133 = vmatpush1.msra.mxu0 0.0
      %134 = vmatprep.subr.mxu0 0.0
      %135 = vmatpush1.msra.mxu0 0.0
      %136 = vmatprep.subr.mxu0 0.0
      %137 = vmatpush1.msra.mxu0 0.0
      %138 = vmatprep.subr.mxu0 0.0
      %139 = vmatpush1.msra.mxu0 0.0
      %140 = vmatprep.subr.mxu0 0.0
      %141 = vmatpush1.msra.mxu0 0.0
      %142 = vmatprep.subr.mxu0 0.0
      %143 = vmatpush1.msra.mxu0 0.0
      %144 = vmatprep.mubr.f32.mxu0 0.0
      %145 = vmatmul.mubr.f32.gmra.mrb[0].mxu0 %v78
      %v146 = vpop.f32.mrb[0].mxu0
      %v147 = vadd.f32 %v74, %v146
      %v148 = vpop.f32.mrb[0].mxu0
      %149 = vdwg.mxu0
      %v150 = vmax.f32 %v147, 0.0
      %151 = vst [vmem:[#allocation2] sm:$0xff] %v150
    $region37: #{tpu_custom_call.1} parent=1 // pred_fallthru
      _
    %v152 = vld [vmem:[#allocation2] sm:$0xff]
    %v153 = vld [vmem:[#allocation8] sm:$0xff]
    %v154 = vld [vmem:[#allocation8 + $0x8] sm:$0xff]
    %v155 = vld [vmem:[#allocation8 + $0x10] sm:$0xff]
    %v156 = vld [vmem:[#allocation8 + $0x18] sm:$0xff]
    %v157 = vld [vmem:[#allocation8 + $0x20] sm:$0xff]
    %v158 = vld [vmem:[#allocation8 + $0x28] sm:$0xff]
    %v159 = vld [vmem:[#allocation8 + $0x30] sm:$0xff]
    %v160 = vld [vmem:[#allocation8 + $0x38] sm:$0xff]
    %v161 = vld [vmem:[#allocation8 + $0x40] sm:$0xff]
    %v162 = vld [vmem:[#allocation8 + $0x48] sm:$0xff]
    %v163 = vld [vmem:[#allocation8 + $0x50] sm:$0xff]
    %v164 = vld [vmem:[#allocation8 + $0x58] sm:$0xff]
    %v165 = vld [vmem:[#allocation8 + $0x60] sm:$0xff]
    %v166 = vld [vmem:[#allocation8 + $0x68] sm:$0xff]
    %v167 = vld [vmem:[#allocation8 + $0x70] sm:$0xff]
    %v168 = vld [vmem:[#allocation8 + $0x78] sm:$0xff]
    %v169 = vld [vmem:[%s4] sm:$0x1]
    %v171 = vlaneseq
    %v172 = vshrl.u32 %v171, 7
    %v173 = vsub.s32 0, %v172
    %v174 = vrot.slane %v169, %v173
    %176 = vmatprep.subr.mxu0 0.0
    %177 = vmatpush1.msra.mxu0 %v153
    %178 = vmatprep.subr.mxu0 0.0
    %179 = vmatpush1.msra.mxu0 %v154
    %180 = vmatprep.subr.mxu0 0.0
    %181 = vmatpush1.msra.mxu0 %v155
    %182 = vmatprep.subr.mxu0 0.0
    %183 = vmatpush1.msra.mxu0 %v156
    %184 = vmatprep.subr.mxu0 0.0
    %185 = vmatpush1.msra.mxu0 %v157
    %186 = vmatprep.subr.mxu0 0.0
    %187 = vmatpush1.msra.mxu0 %v158
    %188 = vmatprep.subr.mxu0 0.0
    %189 = vmatpush1.msra.mxu0 %v159
    %190 = vmatprep.subr.mxu0 0.0
    %191 = vmatpush1.msra.mxu0 %v160
    %192 = vmatprep.subr.mxu0 0.0
    %193 = vmatpush1.msra.mxu0 %v161
    %194 = vmatprep.subr.mxu0 0.0
    %195 = vmatpush1.msra.mxu0 %v162
    %196 = vmatprep.subr.mxu0 0.0
    %197 = vmatpush1.msra.mxu0 %v163
    %198 = vmatprep.subr.mxu0 0.0
    %199 = vmatpush1.msra.mxu0 %v164
    %200 = vmatprep.subr.mxu0 0.0
    %201 = vmatpush1.msra.mxu0 %v165
    %202 = vmatprep.subr.mxu0 0.0
    %203 = vmatpush1.msra.mxu0 %v166
    %204 = vmatprep.subr.mxu0 0.0
    %205 = vmatpush1.msra.mxu0 %v167
    %206 = vmatprep.subr.mxu0 0.0
    %207 = vmatpush1.msra.mxu0 %v168
    %208 = vmatprep.subr.mxu0 0.0
    %209 = vmatpush1.msra.mxu0 0.0
    %210 = vmatprep.subr.mxu0 0.0
    %211 = vmatpush1.msra.mxu0 0.0
    %212 = vmatprep.subr.mxu0 0.0
    %213 = vmatpush1.msra.mxu0 0.0
    %214 = vmatprep.subr.mxu0 0.0
    %215 = vmatpush1.msra.mxu0 0.0
    %216 = vmatprep.subr.mxu0 0.0
    %217 = vmatpush1.msra.mxu0 0.0
    %218 = vmatprep.subr.mxu0 0.0
    %219 = vmatpush1.msra.mxu0 0.0
    %220 = vmatprep.subr.mxu0 0.0
    %221 = vmatpush1.msra.mxu0 0.0
    %222 = vmatprep.subr.mxu0 0.0
    %223 = vmatpush1.msra.mxu0 0.0
    %224 = vmatprep.subr.mxu0 0.0
    %225 = vmatpush1.msra.mxu0 0.0
    %226 = vmatprep.subr.mxu0 0.0
    %227 = vmatpush1.msra.mxu0 0.0
    %228 = vmatprep.subr.mxu0 0.0
    %229 = vmatpush1.msra.mxu0 0.0
    %230 = vmatprep.subr.mxu0 0.0
    %231 = vmatpush1.msra.mxu0 0.0
    %232 = vmatprep.subr.mxu0 0.0
    %233 = vmatpush1.msra.mxu0 0.0
    %234 = vmatprep.subr.mxu0 0.0
    %235 = vmatpush1.msra.mxu0 0.0
    %236 = vmatprep.subr.mxu0 0.0
    %237 = vmatpush1.msra.mxu0 0.0
    %238 = vmatprep.subr.mxu0 0.0
    %239 = vmatpush1.msra.mxu0 0.0
    %240 = vmatprep.mubr.f32.mxu0 0.0
    %241 = vmatmul.mubr.f32.gmra.mrb[0].mxu0 %v152
    %v242 = vpop.f32.mrb[0].mxu0
    %v243 = vadd.f32 %v174, %v242
    %v244 = vpop.f32.mrb[0].mxu0
    %245 = vdwg.mxu0
    %246 = vst [vmem:[#allocation9] sm:$0xff] %v243
    // Predicated region
    $region38: #{tpu_custom_call.1} parent=1 // pred_check
      _
    $region39: #{tpu_custom_call.1} parent=1 // pred_check_branch
      %248 = sbr.rel (0) target = $region41
    $region40: #{tpu_custom_call.1} parent=1 // pred_region
      %s250 = ssub.s32 128, 128
      %251 = vsyncadd [#allocation5], %s250
      %s253 = sshll.u32 [#allocation9], 4
      %s254 = int_to_ptr.vmem [resolvable:$true] %s253
      %256 = dma.vmem_to_hbm [thread:$0]  %s254, 128, %s5, [#allocation5]
    $region41: #{tpu_custom_call.1} parent=1 // pred_fallthru
      _
    // Predicated region
    $region42: #{tpu_custom_call.1} parent=1 // pred_check
      _
    $region43: #{tpu_custom_call.1} parent=1 // pred_check_branch
      %258 = sbr.rel (0) target = $region45
    $region44: #{tpu_custom_call.1} parent=1 // pred_region
      %259 = dma.done [#allocation5], 128
    $region45: #{tpu_custom_call.1} parent=1 // pred_fallthru
      _
    %260 = vsyncpa [#allocation4], 1
    %261 = vsyncpa [#allocation7], 1
    %262 = vsyncpa [#allocation5], 1

// kernel: tpu_custom_call.1
$region0: #{tpu_custom_call.1}
  #allocation0 [shape = 'u32[]', space=smem, size = 0x4, offset = 0x4, fixed_abs, tag = 'smem constant byte address 0x4 - core index']
  #allocation1 [shape = 'u32[144,128]{1,0:T(1,128)}', space=vmem, size = 0x12000, scoped, tag = 'internal scratch']
  #allocation2 [shape = 'f32[8,128]{1,0:T(8,128)}', space=vmem, size = 0x1000, scoped, tag = 'scratch operand']
  %s0 = inlined_call_operand.hbm [shape: f32[8,32], index: 0, kind: input, shape index: {}]
  %s1 = inlined_call_operand.hbm [shape: f32[32,128], index: 1, kind: input, shape index: {}]
  %s2 = inlined_call_operand.vmem [shape: f32[1,128], index: 2, kind: input, shape index: {}]
  %s3 = inlined_call_operand.hbm [shape: f32[128,128], index: 3, kind: input, shape index: {}]
  %s4 = inlined_call_operand.vmem [shape: f32[1,128], index: 4, kind: input, shape index: {}]
  %s5 = inlined_call_operand.hbm [shape: f32[8,128], index: 5, kind: output, shape index: {}]
  %s6 = sld [smem:[#allocation0]]
  $region46: #{tpu_custom_call.1} parent=0
    _
  %s8 = ssub.s32 1, %s6
  %s9 = scalar_select 0, %s8, %s6
  $region1: #{tpu_custom_call.1} parent=0
    #allocation3 [shape = 'u8[4096]{0}', space=vmem, size = 0x1000, scoped, tag = 'input window, operand 0, single buffered']
    #allocation4 [shape = 's32[1]{0}', space=sflag, size = 0x4, scoped, tag = 'scoped memory for tpu_custom_call.1']
    #allocation5 [shape = 's32[1]{0}', space=sflag, size = 0x4, scoped, tag = 'scoped memory for tpu_custom_call.1']
    #allocation6 [shape = 'u8[16384]{0}', space=vmem, size = 0x4000, scoped, tag = 'input window, operand 1, single buffered']
    #allocation7 [shape = 's32[1]{0}', space=sflag, size = 0x4, scoped, tag = 'scoped memory for tpu_custom_call.1']
    #allocation8 [shape = 'u8[65536]{0}', space=vmem, size = 0x10000, scoped, tag = 'input window, operand 3, single buffered']
    #allocation9 [shape = 'u8[4096]{0}', space=vmem, size = 0x1000, scoped, tag = 'output window, operand 0, single buffered']
    %10 = vsyncpa [#allocation4], 0
    %11 = vsyncpa [#allocation7], 0
    %12 = vsyncpa [#allocation5], 0
    // Predicated region
    $region2: #{tpu_custom_call.1} parent=1 // pred_check
      _
    $region3: #{tpu_custom_call.1} parent=1 // pred_check_branch
      %14 = sbr.rel (0) target = $region5
    $region4: #{tpu_custom_call.1} parent=1 // pred_region
      %s16 = ssub.s32 128, 128
      %17 = vsyncadd [#allocation4], %s16
      %s19 = sshll.u32 [#allocation3], 4
      %s20 = int_to_ptr.vmem [resolvable:$true] %s19
      %22 = dma.hbm_to_vmem [thread:$0]  %s0, 128, %s20, [#allocation4]
    $region5: #{tpu_custom_call.1} parent=1 // pred_fallthru
      _
    // Predicated region
    $region6: #{tpu_custom_call.1} parent=1 // pred_check
      _
    $region7: #{tpu_custom_call.1} parent=1 // pred_check_branch
      %24 = sbr.rel (0) target = $region9
    $region8: #{tpu_custom_call.1} parent=1 // pred_region
      %s26 = ssub.s32 512, 512
      %27 = vsyncadd [#allocation7], %s26
      %s28 = sshll.u32 [#allocation6], 4
      %s29 = int_to_ptr.vmem [resolvable:$true] %s28
      %34 = dma.hbm_to_vmem [thread:$0]  %s1, 512, %s29, [#allocation7], 128, 128, 8
    $region9: #{tpu_custom_call.1} parent=1 // pred_fallthru
      _
    // Predicated region
    $region10: #{tpu_custom_call.1} parent=1 // pred_check
      _
    $region11: #{tpu_custom_call.1} parent=1 // pred_check_branch
      %36 = sbr.rel (0) target = $region13
    $region12: #{tpu_custom_call.1} parent=1 // pred_region
      _
    $region13: #{tpu_custom_call.1} parent=1 // pred_fallthru
      _
    // Predicated region
    $region14: #{tpu_custom_call.1} parent=1 // pred_check
      _
    $region15: #{tpu_custom_call.1} parent=1 // pred_check_branch
      %38 = sbr.rel (0) target = $region17
    $region16: #{tpu_custom_call.1} parent=1 // pred_region
      %s40 = ssub.s32 2048, 2048
      %41 = vsyncadd [#allocation7], %s40
      %s42 = sshll.u32 [#allocation8], 4
      %s43 = int_to_ptr.vmem [resolvable:$true] %s42
      %48 = dma.hbm_to_vmem [thread:$0]  %s3, 2048, %s43, [#allocation7], 128, 128, 8
    $region17: #{tpu_custom_call.1} parent=1 // pred_fallthru
      _
    // Predicated region
    $region18: #{tpu_custom_call.1} parent=1 // pred_check
      _
    $region19: #{tpu_custom_call.1} parent=1 // pred_check_branch
      %50 = sbr.rel (0) target = $region21
    $region20: #{tpu_custom_call.1} parent=1 // pred_region
      _
    $region21: #{tpu_custom_call.1} parent=1 // pred_fallthru
      _
    // Predicated region
    $region22: #{tpu_custom_call.1} parent=1 // pred_check
      _
    $region23: #{tpu_custom_call.1} parent=1 // pred_check_branch
      %52 = sbr.rel (0) target = $region25
    $region24: #{tpu_custom_call.1} parent=1 // pred_region
      %53 = dma.done [#allocation4], 128
    $region25: #{tpu_custom_call.1} parent=1 // pred_fallthru
      _
    // Predicated region
    $region26: #{tpu_custom_call.1} parent=1 // pred_check
      _
    $region27: #{tpu_custom_call.1} parent=1 // pred_check_branch
      %55 = sbr.rel (0) target = $region29
    $region28: #{tpu_custom_call.1} parent=1 // pred_region
      %56 = dma.done [#allocation7], 512
    $region29: #{tpu_custom_call.1} parent=1 // pred_fallthru
      _
    // Predicated region
    $region30: #{tpu_custom_call.1} parent=1 // pred_check
      _
    $region31: #{tpu_custom_call.1} parent=1 // pred_check_branch
      %58 = sbr.rel (0) target = $region33
    $region32: #{tpu_custom_call.1} parent=1 // pred_region
      %59 = dma.done [#allocation7], 2048
    $region33: #{tpu_custom_call.1} parent=1 // pred_fallthru
      _
    %p60 = scmp.eq.s32.totalorder 0, 0
    // Predicated region
    $region34: #{tpu_custom_call.1} parent=1 // pred_check
      %p61 = pneg %p60
    $region35: #{tpu_custom_call.1} parent=1 // pred_check_branch
      %63 = sbr.rel (%p61) target = $region37
    $region36: #{tpu_custom_call.1} parent=1 // pred_region
      %v64 = vld [vmem:[#allocation3] sm:$0xff]
      %v65 = vld [vmem:[#allocation6] sm:$0xff]
      %v66 = vld [vmem:[#allocation6 + $0x8] sm:$0xff]
      %v67 = vld [vmem:[#allocation6 + $0x10] sm:$0xff]
      %v68 = vld [vmem:[#allocation6 + $0x18] sm:$0xff]
      %v69 = vld [vmem:[%s2] sm:$0x1]
      %v71 = vlaneseq
      %v72 = vshrl.u32 %v71, 7
      %v73 = vsub.s32 0, %v72
      %v74 = vrot.slane %v69, %v73
      %vm76 = vcmask 261120
      %v78 = vsel %vm76, %v64, 0
      %80 = vmatprep.subr.mxu0 0.0
      %81 = vmatpush1.msra.mxu0 %v65
      %82 = vmatprep.subr.mxu0 0.0
      %83 = vmatpush1.msra.mxu0 %v66
      %84 = vmatprep.subr.mxu0 0.0
      %85 = vmatpush1.msra.mxu0 %v67
      %86 = vmatprep.subr.mxu0 0.0
      %87 = vmatpush1.msra.mxu0 %v68
      %88 = vmatprep.subr.mxu0 0.0
      %89 = vmatpush1.msra.mxu0 0.0
      %90 = vmatprep.subr.mxu0 0.0
      %91 = vmatpush1.msra.mxu0 0.0
      %92 = vmatprep.subr.mxu0 0.0
      %93 = vmatpush1.msra.mxu0 0.0
      %94 = vmatprep.subr.mxu0 0.0
      %95 = vmatpush1.msra.mxu0 0.0
      %96 = vmatprep.subr.mxu0 0.0
      %97 = vmatpush1.msra.mxu0 0.0
      %98 = vmatprep.subr.mxu0 0.0
      %99 = vmatpush1.msra.mxu0 0.0
      %100 = vmatprep.subr.mxu0 0.0
      %101 = vmatpush1.msra.mxu0 0.0
      %102 = vmatprep.subr.mxu0 0.0
      %103 = vmatpush1.msra.mxu0 0.0
      %104 = vmatprep.subr.mxu0 0.0
      %105 = vmatpush1.msra.mxu0 0.0
      %106 = vmatprep.subr.mxu0 0.0
      %107 = vmatpush1.msra.mxu0 0.0
      %108 = vmatprep.subr.mxu0 0.0
      %109 = vmatpush1.msra.mxu0 0.0
      %110 = vmatprep.subr.mxu0 0.0
      %111 = vmatpush1.msra.mxu0 0.0
      %112 = vmatprep.subr.mxu0 0.0
      %113 = vmatpush1.msra.mxu0 0.0
      %114 = vmatprep.subr.mxu0 0.0
      %115 = vmatpush1.msra.mxu0 0.0
      %116 = vmatprep.subr.mxu0 0.0
      %117 = vmatpush1.msra.mxu0 0.0
      %118 = vmatprep.subr.mxu0 0.0
      %119 = vmatpush1.msra.mxu0 0.0
      %120 = vmatprep.subr.mxu0 0.0
      %121 = vmatpush1.msra.mxu0 0.0
      %122 = vmatprep.subr.mxu0 0.0
      %123 = vmatpush1.msra.mxu0 0.0
      %124 = vmatprep.subr.mxu0 0.0
      %125 = vmatpush1.msra.mxu0 0.0
      %126 = vmatprep.subr.mxu0 0.0
      %127 = vmatpush1.msra.mxu0 0.0
      %128 = vmatprep.subr.mxu0 0.0
      %129 = vmatpush1.msra.mxu0 0.0
      %130 = vmatprep.subr.mxu0 0.0
      %131 = vmatpush1.msra.mxu0 0.0
      %132 = vmatprep.subr.mxu0 0.0
      %133 = vmatpush1.msra.mxu0 0.0
      %134 = vmatprep.subr.mxu0 0.0
      %135 = vmatpush1.msra.mxu0 0.0
      %136 = vmatprep.subr.mxu0 0.0
      %137 = vmatpush1.msra.mxu0 0.0
      %138 = vmatprep.subr.mxu0 0.0
      %139 = vmatpush1.msra.mxu0 0.0
      %140 = vmatprep.subr.mxu0 0.0
      %141 = vmatpush1.msra.mxu0 0.0
      %142 = vmatprep.subr.mxu0 0.0
      %143 = vmatpush1.msra.mxu0 0.0
      %144 = vmatprep.mubr.f32.mxu0 0.0
      %145 = vmatmul.mubr.f32.gmra.mrb[0].mxu0 %v78
      %v146 = vpop.f32.mrb[0].mxu0
      %v147 = vadd.f32 %v74, %v146
      %v148 = vpop.f32.mrb[0].mxu0
      %149 = vdwg.mxu0
      %v150 = vmax.f32 %v147, 0.0
      %151 = vst [vmem:[#allocation2] sm:$0xff] %v150
    $region37: #{tpu_custom_call.1} parent=1 // pred_fallthru
      _
    %v152 = vld [vmem:[#allocation2] sm:$0xff]
    %v153 = vld [vmem:[#allocation8] sm:$0xff]
    %v154 = vld [vmem:[#allocation8 + $0x8] sm:$0xff]
    %v155 = vld [vmem:[#allocation8 + $0x10] sm:$0xff]
    %v156 = vld [vmem:[#allocation8 + $0x18] sm:$0xff]
    %v157 = vld [vmem:[#allocation8 + $0x20] sm:$0xff]
    %v158 = vld [vmem:[#allocation8 + $0x28] sm:$0xff]
    %v159 = vld [vmem:[#allocation8 + $0x30] sm:$0xff]
    %v160 = vld [vmem:[#allocation8 + $0x38] sm:$0xff]
    %v161 = vld [vmem:[#allocation8 + $0x40] sm:$0xff]
    %v162 = vld [vmem:[#allocation8 + $0x48] sm:$0xff]
    %v163 = vld [vmem:[#allocation8 + $0x50] sm:$0xff]
    %v164 = vld [vmem:[#allocation8 + $0x58] sm:$0xff]
    %v165 = vld [vmem:[#allocation8 + $0x60] sm:$0xff]
    %v166 = vld [vmem:[#allocation8 + $0x68] sm:$0xff]
    %v167 = vld [vmem:[#allocation8 + $0x70] sm:$0xff]
    %v168 = vld [vmem:[#allocation8 + $0x78] sm:$0xff]
    %v169 = vld [vmem:[%s4] sm:$0x1]
    %v171 = vlaneseq
    %v172 = vshrl.u32 %v171, 7
    %v173 = vsub.s32 0, %v172
    %v174 = vrot.slane %v169, %v173
    %176 = vmatprep.subr.mxu0 0.0
    %177 = vmatpush1.msra.mxu0 %v153
    %178 = vmatprep.subr.mxu0 0.0
    %179 = vmatpush1.msra.mxu0 %v154
    %180 = vmatprep.subr.mxu0 0.0
    %181 = vmatpush1.msra.mxu0 %v155
    %182 = vmatprep.subr.mxu0 0.0
    %183 = vmatpush1.msra.mxu0 %v156
    %184 = vmatprep.subr.mxu0 0.0
    %185 = vmatpush1.msra.mxu0 %v157
    %186 = vmatprep.subr.mxu0 0.0
    %187 = vmatpush1.msra.mxu0 %v158
    %188 = vmatprep.subr.mxu0 0.0
    %189 = vmatpush1.msra.mxu0 %v159
    %190 = vmatprep.subr.mxu0 0.0
    %191 = vmatpush1.msra.mxu0 %v160
    %192 = vmatprep.subr.mxu0 0.0
    %193 = vmatpush1.msra.mxu0 %v161
    %194 = vmatprep.subr.mxu0 0.0
    %195 = vmatpush1.msra.mxu0 %v162
    %196 = vmatprep.subr.mxu0 0.0
    %197 = vmatpush1.msra.mxu0 %v163
    %198 = vmatprep.subr.mxu0 0.0
    %199 = vmatpush1.msra.mxu0 %v164
    %200 = vmatprep.subr.mxu0 0.0
    %201 = vmatpush1.msra.mxu0 %v165
    %202 = vmatprep.subr.mxu0 0.0
    %203 = vmatpush1.msra.mxu0 %v166
    %204 = vmatprep.subr.mxu0 0.0
    %205 = vmatpush1.msra.mxu0 %v167
    %206 = vmatprep.subr.mxu0 0.0
    %207 = vmatpush1.msra.mxu0 %v168
    %208 = vmatprep.subr.mxu0 0.0
    %209 = vmatpush1.msra.mxu0 0.0
    %210 = vmatprep.subr.mxu0 0.0
    %211 = vmatpush1.msra.mxu0 0.0
    %212 = vmatprep.subr.mxu0 0.0
    %213 = vmatpush1.msra.mxu0 0.0
    %214 = vmatprep.subr.mxu0 0.0
    %215 = vmatpush1.msra.mxu0 0.0
    %216 = vmatprep.subr.mxu0 0.0
    %217 = vmatpush1.msra.mxu0 0.0
    %218 = vmatprep.subr.mxu0 0.0
    %219 = vmatpush1.msra.mxu0 0.0
    %220 = vmatprep.subr.mxu0 0.0
    %221 = vmatpush1.msra.mxu0 0.0
    %222 = vmatprep.subr.mxu0 0.0
    %223 = vmatpush1.msra.mxu0 0.0
    %224 = vmatprep.subr.mxu0 0.0
    %225 = vmatpush1.msra.mxu0 0.0
    %226 = vmatprep.subr.mxu0 0.0
    %227 = vmatpush1.msra.mxu0 0.0
    %228 = vmatprep.subr.mxu0 0.0
    %229 = vmatpush1.msra.mxu0 0.0
    %230 = vmatprep.subr.mxu0 0.0
    %231 = vmatpush1.msra.mxu0 0.0
    %232 = vmatprep.subr.mxu0 0.0
    %233 = vmatpush1.msra.mxu0 0.0
    %234 = vmatprep.subr.mxu0 0.0
    %235 = vmatpush1.msra.mxu0 0.0
    %236 = vmatprep.subr.mxu0 0.0
    %237 = vmatpush1.msra.mxu0 0.0
    %238 = vmatprep.subr.mxu0 0.0
    %239 = vmatpush1.msra.mxu0 0.0
    %240 = vmatprep.mubr.f32.mxu0 0.0
    %241 = vmatmul.mubr.f32.gmra.mrb[0].mxu0 %v152
    %v242 = vpop.f32.mrb[0].mxu0
    %v243 = vadd.f32 %v174, %v242
    %v244 = vpop.f32.mrb[0].mxu0
    %245 = vdwg.mxu0
    %246 = vst [vmem:[#allocation9] sm:$0xff] %v243
    // Predicated region
    $region38: #{tpu_custom_call.1} parent=1 // pred_check
      _
    $region39: #{tpu_custom_call.1} parent=1 // pred_check_branch
      %248 = sbr.rel (0) target = $region41
    $region40: #{tpu_custom_call.1} parent=1 // pred_region
      %s250 = ssub.s32 128, 128
      %251 = vsyncadd [#allocation5], %s250
      %s253 = sshll.u32 [#allocation9], 4
      %s254 = int_to_ptr.vmem [resolvable:$true] %s253
      %256 = dma.vmem_to_hbm [thread:$0]  %s254, 128, %s5, [#allocation5]
    $region41: #{tpu_custom_call.1} parent=1 // pred_fallthru
      _
    // Predicated region
    $region42: #{tpu_custom_call.1} parent=1 // pred_check
      _
    $region43: #{tpu_custom_call.1} parent=1 // pred_check_branch
      %258 = sbr.rel (0) target = $region45
    $region44: #{tpu_custom_call.1} parent=1 // pred_region
      %259 = dma.done [#allocation5], 128
    $region45: #{tpu_custom_call.1} parent=1 // pred_fallthru
      _
    %260 = vsyncpa [#allocation4], 1
    %261 = vsyncpa [#allocation7], 1
    %262 = vsyncpa [#allocation5], 1

</llo_original>
